<compile_context>
chip_gen: v5e
topology: v5e:2x2
jax: 0.10.0
libtpu: 0.0.40
codegen_flags: <defaults>
</compile_context>

<pallas_src>
import jax
import jax.numpy as jnp
from jax.experimental import pallas as pl
from jax.experimental.pallas import tpu as pltpu


# ---------------------------------------------------------------- Pallas kernels

def _conv1_kernel(wt_ref, pt_ref, b_ref, o_ref):
    # wt: (Cout, K) f32   pt: (K, TM) f32   b: (Cout, 1) f32   o: (Cout, TM) f32
    acc = jnp.dot(wt_ref[...], pt_ref[...], preferred_element_type=jnp.float32)
    o_ref[...] = (acc + b_ref[...]).astype(o_ref.dtype)


def _fused_qk_se_kernel(p_ref, w_ref, b_ref, g1_ref, g2_ref, pool_ref, bcast_ref, o_ref):
    # p: (M, 2K) f32    w: (2K, C) f32    b: (1, C) f32
    # g1: (C, G) f32    g2: (G, C) f32    pool: (B, M) f32    bcast: (M, B) f32
    # conv2 + conv3 + bias:  Fqk = [P2 | P3] @ [[W2], [W3]] + (b2 + b3)
    fqk = jnp.dot(p_ref[...], w_ref[...], preferred_element_type=jnp.float32) + b_ref[...]
    # grouped SEAttention via small matmuls (block-diagonal fc weights, matmul avg-pool):
    y = jnp.dot(pool_ref[...], fqk, preferred_element_type=jnp.float32)                  # (B, C) pooled
    h = jnp.maximum(jnp.dot(y, g1_ref[...], preferred_element_type=jnp.float32), 0.0)    # (B, G) fc1+ReLU
    s = jax.nn.sigmoid(jnp.dot(h, g2_ref[...], preferred_element_type=jnp.float32))      # (B, C) fc2+Sigmoid
    gate = jnp.dot(bcast_ref[...], s, preferred_element_type=jnp.float32)                # (M, C) per-pixel gate
    o_ref[...] = (fqk * gate).astype(o_ref.dtype)


# ---------------------------------------------------------------- host-side glue

def _im2col_nhwc(x, k, stride, pad):
    # x: (B, H, W, C) -> (B*Ho*Wo, k*k*C); rows ordered (b, oh, ow), cols ordered (kh, kw, c)
    b, h, w, c = x.shape
    xp = jnp.pad(x, ((0, 0), (pad, pad), (pad, pad), (0, 0)))
    ho = (h + 2 * pad - k) // stride + 1
    wo = (w + 2 * pad - k) // stride + 1
    taps = [xp[:, i:i + stride * ho:stride, j:j + stride * wo:stride, :]
            for i in range(k) for j in range(k)]
    p = jnp.stack(taps, axis=3)                       # (B, Ho, Wo, k*k, C)
    return p.reshape(b * ho * wo, k * k * c), ho, wo


def _im2col_cmajor(x, k, stride, pad):
    # x: (C, B, H, W) (channel-major, as produced by the conv1 kernel)
    #   -> (B*Ho*Wo, k*k*C); rows ordered (b, oh, ow), cols ordered (kh, kw, c)
    c, b, h, w = x.shape
    xp = jnp.pad(x, ((0, 0), (0, 0), (pad, pad), (pad, pad)))
    ho = (h + 2 * pad - k) // stride + 1
    wo = (w + 2 * pad - k) // stride + 1
    taps = [xp[:, :, i:i + stride * ho:stride, j:j + stride * wo:stride]
            for i in range(k) for j in range(k)]
    p = jnp.stack(taps, axis=0)                       # (k*k, C, B, Ho, Wo)
    p = p.transpose(2, 3, 4, 0, 1)                    # (B, Ho, Wo, k*k, C)
    return p.reshape(b * ho * wo, k * k * c), ho, wo


def _reorder_w(w):
    # (Cout, Cin, KH, KW) -> (KH*KW*Cin, Cout), matching the (kh, kw, c) patch column order
    cout, cin, kh, kw = w.shape
    return w.transpose(2, 3, 1, 0).reshape(kh * kw * cin, cout)


def conv1_pallas(f_nhwc, w, bias, *, tm=128):
    """7x7 / stride 4 / pad 2 conv as an M-tiled MXU matmul; returns (Cout, B*Ho*Wo)."""
    cout, cin, k, _ = w.shape
    p, ho, wo = _im2col_nhwc(f_nhwc, k, 4, 2)
    m, kdim = p.shape
    m_pad = ((m + tm - 1) // tm) * tm
    pt = p.astype(jnp.float32).T                      # (K, M): lane-dense RHS / output columns
    if m_pad != m:
        pt = jnp.pad(pt, ((0, 0), (0, m_pad - m)))
    wt = _reorder_w(w).T.astype(jnp.float32)          # (Cout, K)
    b_col = bias.reshape(cout, 1).astype(jnp.float32)
    out = pl.pallas_call(
        _conv1_kernel,
        out_shape=jax.ShapeDtypeStruct((cout, m_pad), jnp.float32),
        grid=(m_pad // tm,),
        in_specs=[pl.BlockSpec((cout, kdim), lambda i: (0, 0)),
                  pl.BlockSpec((kdim, tm), lambda i: (0, i)),
                  pl.BlockSpec((cout, 1), lambda i: (0, 0))],
        out_specs=pl.BlockSpec((cout, tm), lambda i: (0, i)),
        compiler_params=pltpu.CompilerParams(
            dimension_semantics=("parallel",),
            vmem_limit_bytes=32 * 1024 * 1024),
    )(wt, pt, b_col)
    return out[:, :m], ho, wo


def fused_qk_se_pallas(p2, p3, w2m, w3m, bias_qk, g1, g2, pool, bcast):
    m2 = p2.shape[0]
    cout = w2m.shape[1]
    p_cat = jnp.concatenate([p2, p3], axis=1).astype(jnp.float32)      # (M, 2K)
    w_cat = jnp.concatenate([w2m, w3m], axis=0).astype(jnp.float32)    # (2K, C)
    return pl.pallas_call(
        _fused_qk_se_kernel,
        out_shape=jax.ShapeDtypeStruct((m2, cout), jnp.float32),
        in_specs=[pl.BlockSpec(memory_space=pltpu.MemorySpace.VMEM)] * 7,
        out_specs=pl.BlockSpec(memory_space=pltpu.MemorySpace.VMEM),
    )(p_cat, w_cat, bias_qk, g1, g2, pool, bcast)


# ---------------------------------------------------------------- forward

def init_params(in_dim, key):
    ks = jax.random.split(key, 8)

    def conv_w(kk, cout, cin, ksz):
        bound = 1.0 / jnp.sqrt(cin * ksz * ksz)
        return jax.random.uniform(kk, (cout, cin, ksz, ksz), jnp.float32, -bound, bound)

    def conv_b(kk, cout, cin, ksz):
        bound = 1.0 / jnp.sqrt(cin * ksz * ksz)
        return jax.random.uniform(kk, (cout,), jnp.float32, -bound, bound)

    return {
        "w1": conv_w(ks[0], in_dim, in_dim, 7), "b1": conv_b(ks[1], in_dim, in_dim, 7),
        "w2": conv_w(ks[2], in_dim, in_dim, 3), "b2": conv_b(ks[3], in_dim, in_dim, 3),
        "w3": conv_w(ks[4], in_dim, in_dim, 3), "b3": conv_b(ks[5], in_dim, in_dim, 3),
        # SEAttention(channel=3, reduction=3): fc1 = Linear(3,1,bias=False), fc2 = Linear(1,3,bias=False)
        "se_w1": jax.random.normal(ks[6], (1, 3), jnp.float32) * 0.5,   # fc1.weight (1, 3)
        "se_w2": jax.random.normal(ks[7], (3, 1), jnp.float32) * 0.5,   # fc2.weight (3, 1)
    }


@jax.jit
def safa_forward(params, f, fq):
    b, c = f.shape[0], f.shape[1]
    n_grp = c // 3
    # one-time layout conversion of the raw NCHW inputs to channels-last
    f_nhwc = jnp.transpose(f, (0, 2, 3, 1))
    fq_nhwc = jnp.transpose(fq, (0, 2, 3, 1))

    # ---- kernel 1: conv1, lane-dense channel-major output (C, B*H1*W1) ----
    q1_cm, ho1, wo1 = conv1_pallas(f_nhwc, params["w1"], params["b1"])
    q1 = q1_cm.reshape(c, b, ho1, wo1)                # stays channel-major, no NCHW round trip

    # ---- tiny im2col patches for conv2 / conv3 (a few KB of host glue) ----
    p2, ho2, wo2 = _im2col_cmajor(q1, 3, 2, 1)
    p3, _, _ = _im2col_nhwc(fq_nhwc, 3, 2, 1)
    hw = ho2 * wo2

    w2m = _reorder_w(params["w2"])
    w3m = _reorder_w(params["w3"])
    bias_qk = (params["b2"] + params["b3"]).reshape(1, c).astype(jnp.float32)

    # grouped-SE fc weights as block-diagonal matrices; avg-pool / broadcast as matmuls
    eye_g = jnp.eye(n_grp, dtype=jnp.float32)
    g1 = jnp.kron(eye_g, params["se_w1"].T)           # (C, G):  G1[3g+i, g] = fc1.w[0, i]
    g2 = jnp.kron(eye_g, params["se_w2"].T)           # (G, C):  G2[g, 3g+i] = fc2.w[i, 0]
    eye_b = jnp.eye(b, dtype=jnp.float32)
    pool = jnp.kron(eye_b, jnp.full((1, hw), 1.0 / hw, jnp.float32))   # (B, B*hw)
    bcast = jnp.kron(eye_b, jnp.ones((hw, 1), jnp.float32))            # (B*hw, B)

    # ---- kernel 2: conv2 + conv3 + (Q + K) + 8x SEAttention, fully fused ----
    out = fused_qk_se_pallas(p2, p3, w2m, w3m, bias_qk, g1, g2, pool, bcast)

    # single tiny conversion back to the module's NCHW output layout
    return out.reshape(b, ho2, wo2, c).transpose(0, 3, 1, 2)


# ---------------------------------------------------------------- pure-JAX reference

def _reference(params, f, fq):
    def conv(x, w, b, s, p):
        y = jax.lax.conv_general_dilated(
            x, w, (s, s), [(p, p), (p, p)],
            dimension_numbers=("NCHW", "OIHW", "NCHW"))
        return y + b[None, :, None, None]

    q = conv(f, params["w1"], params["b1"], 4, 2)
    q = conv(q, params["w2"], params["b2"], 2, 1)
    k = conv(fq, params["w3"], params["b3"], 2, 1)
    fqk = q + k
    w1 = params["se_w1"]          # (1, 3)
    w2 = params["se_w2"]          # (3, 1)
    outs = []
    for g in range(fqk.shape[1] // 3):
        xg = fqk[:, 3 * g:3 * g + 3]
        y = xg.mean(axis=(2, 3))
        h = jax.nn.relu(y @ w1.T)
        sgm = jax.nn.sigmoid(h @ w2.T)
        outs.append(xg * sgm[:, :, None, None])
    return jnp.concatenate(outs, axis=1)


if __name__ == "__main__":
    in_dim = 24  # the forward pass slices 8 groups of 3 channels -> in_dim must be 24
    key = jax.random.PRNGKey(0)
    kf, kq, kp = jax.random.split(key, 3)
    f = jax.random.normal(kf, (2, in_dim, 32, 32), jnp.float32)   # SAFA input F
    fq = jax.random.normal(kq, (2, in_dim, 8, 8), jnp.float32)    # SAFA input Fq (spatial = conv1 output)
    params = init_params(in_dim, kp)

    out = jax.block_until_ready(safa_forward(params, f, fq))
    assert out.shape == (2, in_dim, 4, 4), out.shape
    ref = _reference(params, f, fq)
    err = float(jnp.max(jnp.abs(out - ref)))
    # f32 MXU operands with f32 accumulation -> tight tolerance vs the pure-f32 reference
    assert jnp.allclose(out, ref, atol=2e-4, rtol=2e-4), err
    print("KERNEL_OK")
</pallas_src>

<mosaic_0001>
module attributes {stable_mosaic.version = 11 : i64} {
  func.func @_conv1_kernel(%arg0: i32, %arg1: memref<24x1176xf32, #tpu.memory_space<vmem>>, %arg2: memref<1176x128xf32, #tpu.memory_space<vmem>>, %arg3: memref<24x1xf32, #tpu.memory_space<vmem>>, %arg4: memref<24x128xf32, #tpu.memory_space<vmem>>) attributes {dimension_semantics = [#tpu.dimension_semantics<parallel>], iteration_bounds = array<i64: 1>, scalar_prefetch = 0 : i64, scratch_operands = 0 : i64, tpu.core_type = #tpu.core_type<tc>, window_params = [{pipeline_mode = #tpu.pipeline_mode<synchronous>, transform_indices = @transform_0, window_bounds = array<i64: 24, 1176>}, {transform_indices = @transform_1, window_bounds = array<i64: 1176, 128>}, {pipeline_mode = #tpu.pipeline_mode<synchronous>, transform_indices = @transform_2, window_bounds = array<i64: 24, 1>}, {transform_indices = @transform_3, window_bounds = array<i64: 24, 128>}]} {
    %c0 = arith.constant 0 : index
    %c0_0 = arith.constant 0 : index
    %0 = vector.load %arg1[%c0, %c0_0] : memref<24x1176xf32, #tpu.memory_space<vmem>>, vector<24x1176xf32>
    %c0_1 = arith.constant 0 : index
    %c0_2 = arith.constant 0 : index
    %1 = vector.load %arg2[%c0_1, %c0_2] : memref<1176x128xf32, #tpu.memory_space<vmem>>, vector<1176x128xf32>
    %cst = arith.constant dense<0.000000e+00> : vector<24x128xf32>
    %2 = tpu.matmul %0, %1, %cst {dimension_numbers = #tpu.dot_dimension_numbers<[1], [0], [0], [1], [0, 0, 1, 1], [], []>} : vector<24x1176xf32>, vector<1176x128xf32>, vector<24x128xf32> -> vector<24x128xf32>
    %c0_3 = arith.constant 0 : index
    %c0_4 = arith.constant 0 : index
    %3 = vector.load %arg3[%c0_3, %c0_4] : memref<24x1xf32, #tpu.memory_space<vmem>>, vector<24x1xf32>
    %4 = vector.broadcast %3 : vector<24x1xf32> to vector<24x128xf32>
    %5 = arith.addf %2, %4 : vector<24x128xf32>
    %c0_5 = arith.constant 0 : index
    %c0_6 = arith.constant 0 : index
    %6 = vector.load %arg4[%c0_5, %c0_6] : memref<24x128xf32, #tpu.memory_space<vmem>>, vector<24x128xf32>
    tpu.vector_store %arg4[%c0_5, %c0_6], %5 {strides = array<i32>} : memref<24x128xf32, #tpu.memory_space<vmem>>, vector<24x128xf32>,
    return
  }
  func.func @transform_0(%arg0: i32) -> (i32, i32) {
    %c0_i32 = arith.constant 0 : i32
    %c0_i32_0 = arith.constant 0 : i32
    %c0_i32_1 = arith.constant 0 : i32
    return %c0_i32, %c0_i32_0 : i32, i32
  }
  func.func @transform_1(%arg0: i32) -> (i32, i32) {
    %c0_i32 = arith.constant 0 : i32
    %c0_i32_0 = arith.constant 0 : i32
    return %c0_i32, %arg0 : i32, i32
  }
  func.func @transform_2(%arg0: i32) -> (i32, i32) {
    %c0_i32 = arith.constant 0 : i32
    %c0_i32_0 = arith.constant 0 : i32
    %c0_i32_1 = arith.constant 0 : i32
    return %c0_i32, %c0_i32_0 : i32, i32
  }
  func.func @transform_3(%arg0: i32) -> (i32, i32) {
    %c0_i32 = arith.constant 0 : i32
    %c0_i32_0 = arith.constant 0 : i32
    return %c0_i32, %arg0 : i32, i32
  }
}

module attributes {stable_mosaic.version = 11 : i64} {
  func.func @_fused_qk_se_kernel(%arg0: memref<32x432xf32, #tpu.memory_space<vmem>>, %arg1: memref<432x24xf32, #tpu.memory_space<vmem>>, %arg2: memref<1x24xf32, #tpu.memory_space<vmem>>, %arg3: memref<24x8xf32, #tpu.memory_space<vmem>>, %arg4: memref<8x24xf32, #tpu.memory_space<vmem>>, %arg5: memref<2x32xf32, #tpu.memory_space<vmem>>, %arg6: memref<32x2xf32, #tpu.memory_space<vmem>>, %arg7: memref<32x24xf32, #tpu.memory_space<vmem>>) attributes {dimension_semantics = [], scalar_prefetch = 0 : i64, scratch_operands = 0 : i64, tpu.core_type = #tpu.core_type<tc>} {
    %c0 = arith.constant 0 : index
    %c0_0 = arith.constant 0 : index
    %0 = vector.load %arg0[%c0, %c0_0] : memref<32x432xf32, #tpu.memory_space<vmem>>, vector<32x432xf32>
    %c0_1 = arith.constant 0 : index
    %c0_2 = arith.constant 0 : index
    %1 = vector.load %arg1[%c0_1, %c0_2] : memref<432x24xf32, #tpu.memory_space<vmem>>, vector<432x24xf32>
    %cst = arith.constant dense<0.000000e+00> : vector<32x24xf32>
    %2 = tpu.matmul %0, %1, %cst {dimension_numbers = #tpu.dot_dimension_numbers<[1], [0], [0], [1], [0, 0, 1, 1], [], []>} : vector<32x432xf32>, vector<432x24xf32>, vector<32x24xf32> -> vector<32x24xf32>
    %c0_3 = arith.constant 0 : index
    %c0_4 = arith.constant 0 : index
    %3 = vector.load %arg2[%c0_3, %c0_4] : memref<1x24xf32, #tpu.memory_space<vmem>>, vector<1x24xf32>
    %4 = vector.broadcast %3 : vector<1x24xf32> to vector<32x24xf32>
    %5 = arith.addf %2, %4 : vector<32x24xf32>
    %c0_5 = arith.constant 0 : index
    %c0_6 = arith.constant 0 : index
    %6 = vector.load %arg5[%c0_5, %c0_6] : memref<2x32xf32, #tpu.memory_space<vmem>>, vector<2x32xf32>
    %cst_7 = arith.constant dense<0.000000e+00> : vector<2x24xf32>
    %7 = tpu.matmul %6, %5, %cst_7 {dimension_numbers = #tpu.dot_dimension_numbers<[1], [0], [0], [1], [0, 0, 1, 1], [], []>} : vector<2x32xf32>, vector<32x24xf32>, vector<2x24xf32> -> vector<2x24xf32>
    %c0_8 = arith.constant 0 : index
    %c0_9 = arith.constant 0 : index
    %8 = vector.load %arg3[%c0_8, %c0_9] : memref<24x8xf32, #tpu.memory_space<vmem>>, vector<24x8xf32>
    %cst_10 = arith.constant dense<0.000000e+00> : vector<2x8xf32>
    %9 = tpu.matmul %7, %8, %cst_10 {dimension_numbers = #tpu.dot_dimension_numbers<[1], [0], [0], [1], [0, 0, 1, 1], [], []>} : vector<2x24xf32>, vector<24x8xf32>, vector<2x8xf32> -> vector<2x8xf32>
    %cst_11 = arith.constant 0.000000e+00 : f32
    %10 = vector.broadcast %cst_11 : f32 to vector<2x8xf32>
    %11 = arith.maximumf %9, %10 : vector<2x8xf32>
    %c0_12 = arith.constant 0 : index
    %c0_13 = arith.constant 0 : index
    %12 = vector.load %arg4[%c0_12, %c0_13] : memref<8x24xf32, #tpu.memory_space<vmem>>, vector<8x24xf32>
    %cst_14 = arith.constant dense<0.000000e+00> : vector<2x24xf32>
    %13 = tpu.matmul %11, %12, %cst_14 {dimension_numbers = #tpu.dot_dimension_numbers<[1], [0], [0], [1], [0, 0, 1, 1], [], []>} : vector<2x8xf32>, vector<8x24xf32>, vector<2x24xf32> -> vector<2x24xf32>
    %14 = arith.negf %13 : vector<2x24xf32>
    %15 = math.exp %14 : vector<2x24xf32>
    %cst_15 = arith.constant 1.000000e+00 : f32
    %16 = vector.broadcast %cst_15 : f32 to vector<2x24xf32>
    %17 = arith.addf %16, %15 : vector<2x24xf32>
    %18 = arith.divf %16, %17 : vector<2x24xf32>
    %c0_16 = arith.constant 0 : index
    %c0_17 = arith.constant 0 : index
    %19 = vector.load %arg6[%c0_16, %c0_17] : memref<32x2xf32, #tpu.memory_space<vmem>>, vector<32x2xf32>
    %cst_18 = arith.constant dense<0.000000e+00> : vector<32x24xf32>
    %20 = tpu.matmul %19, %18, %cst_18 {dimension_numbers = #tpu.dot_dimension_numbers<[1], [0], [0], [1], [0, 0, 1, 1], [], []>} : vector<32x2xf32>, vector<2x24xf32>, vector<32x24xf32> -> vector<32x24xf32>
    %21 = arith.mulf %5, %20 : vector<32x24xf32>
    %c0_19 = arith.constant 0 : index
    %c0_20 = arith.constant 0 : index
    %22 = vector.load %arg7[%c0_19, %c0_20] : memref<32x24xf32, #tpu.memory_space<vmem>>, vector<32x24xf32>
    tpu.vector_store %arg7[%c0_19, %c0_20], %21 {strides = array<i32>} : memref<32x24xf32, #tpu.memory_space<vmem>>, vector<32x24xf32>,
    return
  }
}

</mosaic_0001>

<llo_original>
// kernel: safa_forward.2
$region0: #{safa_forward.2}
  #allocation0 [shape = 'u32[]', space=smem, size = 0x4, offset = 0x4, fixed_abs, tag = 'smem constant byte address 0x4 - core index']
  #allocation1 [shape = 'u32[72,128]{1,0:T(1,128)}', space=vmem, size = 0x9000, scoped, tag = 'internal scratch']
  %s0 = inlined_call_operand.vmem [shape: f32[24,1176], index: 0, kind: input, shape index: {}]
  %s1 = inlined_call_operand.vmem [shape: f32[1176,128], index: 1, kind: input, shape index: {}]
  %s2 = inlined_call_operand.vmem [shape: f32[24,1], index: 2, kind: input, shape index: {}]
  %s3 = inlined_call_operand.vmem [shape: f32[24,128], index: 3, kind: output, shape index: {}]
  %s4 = sld [smem:[#allocation0]]
  $region22: #{safa_forward.2} parent=0
    _
  %s6 = ssub.s32 1, %s4
  %s7 = scalar_select 0, %s6, %s4
  // Predicated region
  $region2: #{safa_forward.2} parent=0 // pred_check
    _
  $region3: #{safa_forward.2} parent=0 // pred_check_branch
    %9 = sbr.rel (0) target = $region5
  $region4: #{safa_forward.2} parent=0 // pred_region
    _
  $region5: #{safa_forward.2} parent=0 // pred_fallthru
    _
  // Predicated region
  $region6: #{safa_forward.2} parent=0 // pred_check
    _
  $region7: #{safa_forward.2} parent=0 // pred_check_branch
    %11 = sbr.rel (0) target = $region9
  $region8: #{safa_forward.2} parent=0 // pred_region
    _
  $region9: #{safa_forward.2} parent=0 // pred_fallthru
    _
  // Predicated region
  $region10: #{safa_forward.2} parent=0 // pred_check
    _
  $region11: #{safa_forward.2} parent=0 // pred_check_branch
    %13 = sbr.rel (0) target = $region13
  $region12: #{safa_forward.2} parent=0 // pred_region
    _
  $region13: #{safa_forward.2} parent=0 // pred_fallthru
    _
  %v14 = vld [vmem:[%s0] sm:$0xff]
  %v15 = vld [vmem:[%s0 + $0x8] sm:$0xff]
  %v16 = vld [vmem:[%s0 + $0x10] sm:$0xff]
  %v17 = vld [vmem:[%s0 + $0x18] sm:$0xff]
  %v18 = vld [vmem:[%s0 + $0x20] sm:$0xff]
  %v19 = vld [vmem:[%s0 + $0x28] sm:$0xff]
  %v20 = vld [vmem:[%s0 + $0x30] sm:$0xff]
  %v21 = vld [vmem:[%s0 + $0x38] sm:$0xff]
  %v22 = vld [vmem:[%s0 + $0x40] sm:$0xff]
  %v23 = vld [vmem:[%s0 + $0x48] sm:$0xff]
  %v24 = vld [vmem:[%s0 + $0x50] sm:$0xff]
  %v25 = vld [vmem:[%s0 + $0x58] sm:$0xff]
  %v26 = vld [vmem:[%s0 + $0x60] sm:$0xff]
  %v27 = vld [vmem:[%s0 + $0x68] sm:$0xff]
  %v28 = vld [vmem:[%s0 + $0x70] sm:$0xff]
  %v29 = vld [vmem:[%s0 + $0x78] sm:$0xff]
  %v30 = vld [vmem:[%s0 + $0x80] sm:$0xff]
  %v31 = vld [vmem:[%s0 + $0x88] sm:$0xff]
  %v32 = vld [vmem:[%s0 + $0x90] sm:$0xff]
  %v33 = vld [vmem:[%s0 + $0x98] sm:$0xff]
  %v34 = vld [vmem:[%s0 + $0xa0] sm:$0xff]
  %v35 = vld [vmem:[%s0 + $0xa8] sm:$0xff]
  %v36 = vld [vmem:[%s0 + $0xb0] sm:$0xff]
  %v37 = vld [vmem:[%s0 + $0xb8] sm:$0xff]
  %v38 = vld [vmem:[%s0 + $0xc0] sm:$0xff]
  %v39 = vld [vmem:[%s0 + $0xc8] sm:$0xff]
  %v40 = vld [vmem:[%s0 + $0xd0] sm:$0xff]
  %v41 = vld [vmem:[%s0 + $0xd8] sm:$0xff]
  %v42 = vld [vmem:[%s0 + $0xe0] sm:$0xff]
  %v43 = vld [vmem:[%s0 + $0xe8] sm:$0xff]
  %v44 = vld [vmem:[%s1] sm:$0xff]
  %v45 = vld [vmem:[%s1 + $0x8] sm:$0xff]
  %v46 = vld [vmem:[%s1 + $0x10] sm:$0xff]
  %v47 = vld [vmem:[%s1 + $0x18] sm:$0xff]
  %v48 = vld [vmem:[%s1 + $0x20] sm:$0xff]
  %v49 = vld [vmem:[%s1 + $0x28] sm:$0xff]
  %v50 = vld [vmem:[%s1 + $0x30] sm:$0xff]
  %v51 = vld [vmem:[%s1 + $0x38] sm:$0xff]
  %v52 = vld [vmem:[%s1 + $0x40] sm:$0xff]
  %v53 = vld [vmem:[%s1 + $0x48] sm:$0xff]
  %v54 = vld [vmem:[%s1 + $0x50] sm:$0xff]
  %v55 = vld [vmem:[%s1 + $0x58] sm:$0xff]
  %v56 = vld [vmem:[%s1 + $0x60] sm:$0xff]
  %v57 = vld [vmem:[%s1 + $0x68] sm:$0xff]
  %v58 = vld [vmem:[%s1 + $0x70] sm:$0xff]
  %v59 = vld [vmem:[%s1 + $0x78] sm:$0xff]
  %v60 = vld [vmem:[%s1 + $0x80] sm:$0xff]
  %v61 = vld [vmem:[%s1 + $0x88] sm:$0xff]
  %v62 = vld [vmem:[%s1 + $0x90] sm:$0xff]
  %v63 = vld [vmem:[%s1 + $0x98] sm:$0xff]
  %v64 = vld [vmem:[%s1 + $0xa0] sm:$0xff]
  %v65 = vld [vmem:[%s1 + $0xa8] sm:$0xff]
  %v66 = vld [vmem:[%s1 + $0xb0] sm:$0xff]
  %v67 = vld [vmem:[%s1 + $0xb8] sm:$0xff]
  %v68 = vld [vmem:[%s1 + $0xc0] sm:$0xff]
  %v69 = vld [vmem:[%s1 + $0xc8] sm:$0xff]
  %v70 = vld [vmem:[%s1 + $0xd0] sm:$0xff]
  %v71 = vld [vmem:[%s1 + $0xd8] sm:$0xff]
  %v72 = vld [vmem:[%s1 + $0xe0] sm:$0xff]
  %v73 = vld [vmem:[%s1 + $0xe8] sm:$0xff]
  %v74 = vld [vmem:[%s1 + $0xf0] sm:$0xff]
  %v75 = vld [vmem:[%s1 + $0xf8] sm:$0xff]
  %v76 = vld [vmem:[%s1 + $0x100] sm:$0xff]
  %v77 = vld [vmem:[%s1 + $0x108] sm:$0xff]
  %v78 = vld [vmem:[%s1 + $0x110] sm:$0xff]
  %v79 = vld [vmem:[%s1 + $0x118] sm:$0xff]
  %v80 = vld [vmem:[%s1 + $0x120] sm:$0xff]
  %v81 = vld [vmem:[%s1 + $0x128] sm:$0xff]
  %v82 = vld [vmem:[%s1 + $0x130] sm:$0xff]
  %v83 = vld [vmem:[%s1 + $0x138] sm:$0xff]
  %v84 = vld [vmem:[%s1 + $0x140] sm:$0xff]
  %v85 = vld [vmem:[%s1 + $0x148] sm:$0xff]
  %v86 = vld [vmem:[%s1 + $0x150] sm:$0xff]
  %v87 = vld [vmem:[%s1 + $0x158] sm:$0xff]
  %v88 = vld [vmem:[%s1 + $0x160] sm:$0xff]
  %v89 = vld [vmem:[%s1 + $0x168] sm:$0xff]
  %v90 = vld [vmem:[%s1 + $0x170] sm:$0xff]
  %v91 = vld [vmem:[%s1 + $0x178] sm:$0xff]
  %v92 = vld [vmem:[%s1 + $0x180] sm:$0xff]
  %v93 = vld [vmem:[%s1 + $0x188] sm:$0xff]
  %v94 = vld [vmem:[%s1 + $0x190] sm:$0xff]
  %v95 = vld [vmem:[%s1 + $0x198] sm:$0xff]
  %v96 = vld [vmem:[%s1 + $0x1a0] sm:$0xff]
  %v97 = vld [vmem:[%s1 + $0x1a8] sm:$0xff]
  %v98 = vld [vmem:[%s1 + $0x1b0] sm:$0xff]
  %v99 = vld [vmem:[%s1 + $0x1b8] sm:$0xff]
  %v100 = vld [vmem:[%s1 + $0x1c0] sm:$0xff]
  %v101 = vld [vmem:[%s1 + $0x1c8] sm:$0xff]
  %v102 = vld [vmem:[%s1 + $0x1d0] sm:$0xff]
  %v103 = vld [vmem:[%s1 + $0x1d8] sm:$0xff]
  %v104 = vld [vmem:[%s1 + $0x1e0] sm:$0xff]
  %v105 = vld [vmem:[%s1 + $0x1e8] sm:$0xff]
  %v106 = vld [vmem:[%s1 + $0x1f0] sm:$0xff]
  %v107 = vld [vmem:[%s1 + $0x1f8] sm:$0xff]
  %v108 = vld [vmem:[%s1 + $0x200] sm:$0xff]
  %v109 = vld [vmem:[%s1 + $0x208] sm:$0xff]
  %v110 = vld [vmem:[%s1 + $0x210] sm:$0xff]
  %v111 = vld [vmem:[%s1 + $0x218] sm:$0xff]
  %v112 = vld [vmem:[%s1 + $0x220] sm:$0xff]
  %v113 = vld [vmem:[%s1 + $0x228] sm:$0xff]
  %v114 = vld [vmem:[%s1 + $0x230] sm:$0xff]
  %v115 = vld [vmem:[%s1 + $0x238] sm:$0xff]
  %v116 = vld [vmem:[%s1 + $0x240] sm:$0xff]
  %v117 = vld [vmem:[%s1 + $0x248] sm:$0xff]
  %v118 = vld [vmem:[%s1 + $0x250] sm:$0xff]
  %v119 = vld [vmem:[%s1 + $0x258] sm:$0xff]
  %v120 = vld [vmem:[%s1 + $0x260] sm:$0xff]
  %v121 = vld [vmem:[%s1 + $0x268] sm:$0xff]
  %v122 = vld [vmem:[%s1 + $0x270] sm:$0xff]
  %v123 = vld [vmem:[%s1 + $0x278] sm:$0xff]
  %v124 = vld [vmem:[%s1 + $0x280] sm:$0xff]
  %v125 = vld [vmem:[%s1 + $0x288] sm:$0xff]
  %v126 = vld [vmem:[%s1 + $0x290] sm:$0xff]
  %v127 = vld [vmem:[%s1 + $0x298] sm:$0xff]
  %v128 = vld [vmem:[%s1 + $0x2a0] sm:$0xff]
  %v129 = vld [vmem:[%s1 + $0x2a8] sm:$0xff]
  %v130 = vld [vmem:[%s1 + $0x2b0] sm:$0xff]
  %v131 = vld [vmem:[%s1 + $0x2b8] sm:$0xff]
  %v132 = vld [vmem:[%s1 + $0x2c0] sm:$0xff]
  %v133 = vld [vmem:[%s1 + $0x2c8] sm:$0xff]
  %v134 = vld [vmem:[%s1 + $0x2d0] sm:$0xff]
  %v135 = vld [vmem:[%s1 + $0x2d8] sm:$0xff]
  %v136 = vld [vmem:[%s1 + $0x2e0] sm:$0xff]
  %v137 = vld [vmem:[%s1 + $0x2e8] sm:$0xff]
  %v138 = vld [vmem:[%s1 + $0x2f0] sm:$0xff]
  %v139 = vld [vmem:[%s1 + $0x2f8] sm:$0xff]
  %v140 = vld [vmem:[%s1 + $0x300] sm:$0xff]
  %v141 = vld [vmem:[%s1 + $0x308] sm:$0xff]
  %v142 = vld [vmem:[%s1 + $0x310] sm:$0xff]
  %v143 = vld [vmem:[%s1 + $0x318] sm:$0xff]
  %v144 = vld [vmem:[%s1 + $0x320] sm:$0xff]
  %v145 = vld [vmem:[%s1 + $0x328] sm:$0xff]
  %v146 = vld [vmem:[%s1 + $0x330] sm:$0xff]
  %v147 = vld [vmem:[%s1 + $0x338] sm:$0xff]
  %v148 = vld [vmem:[%s1 + $0x340] sm:$0xff]
  %v149 = vld [vmem:[%s1 + $0x348] sm:$0xff]
  %v150 = vld [vmem:[%s1 + $0x350] sm:$0xff]
  %v151 = vld [vmem:[%s1 + $0x358] sm:$0xff]
  %v152 = vld [vmem:[%s1 + $0x360] sm:$0xff]
  %v153 = vld [vmem:[%s1 + $0x368] sm:$0xff]
  %v154 = vld [vmem:[%s1 + $0x370] sm:$0xff]
  %v155 = vld [vmem:[%s1 + $0x378] sm:$0xff]
  %v156 = vld [vmem:[%s1 + $0x380] sm:$0xff]
  %v157 = vld [vmem:[%s1 + $0x388] sm:$0xff]
  %v158 = vld [vmem:[%s1 + $0x390] sm:$0xff]
  %v159 = vld [vmem:[%s1 + $0x398] sm:$0xff]
  %v160 = vld [vmem:[%s1 + $0x3a0] sm:$0xff]
  %v161 = vld [vmem:[%s1 + $0x3a8] sm:$0xff]
  %v162 = vld [vmem:[%s1 + $0x3b0] sm:$0xff]
  %v163 = vld [vmem:[%s1 + $0x3b8] sm:$0xff]
  %v164 = vld [vmem:[%s1 + $0x3c0] sm:$0xff]
  %v165 = vld [vmem:[%s1 + $0x3c8] sm:$0xff]
  %v166 = vld [vmem:[%s1 + $0x3d0] sm:$0xff]
  %v167 = vld [vmem:[%s1 + $0x3d8] sm:$0xff]
  %v168 = vld [vmem:[%s1 + $0x3e0] sm:$0xff]
  %v169 = vld [vmem:[%s1 + $0x3e8] sm:$0xff]
  %v170 = vld [vmem:[%s1 + $0x3f0] sm:$0xff]
  %v171 = vld [vmem:[%s1 + $0x3f8] sm:$0xff]
  %v172 = vld [vmem:[%s1 + $0x400] sm:$0xff]
  %v173 = vld [vmem:[%s1 + $0x408] sm:$0xff]
  %v174 = vld [vmem:[%s1 + $0x410] sm:$0xff]
  %v175 = vld [vmem:[%s1 + $0x418] sm:$0xff]
  %v176 = vld [vmem:[%s1 + $0x420] sm:$0xff]
  %v177 = vld [vmem:[%s1 + $0x428] sm:$0xff]
  %v178 = vld [vmem:[%s1 + $0x430] sm:$0xff]
  %v179 = vld [vmem:[%s1 + $0x438] sm:$0xff]
  %v180 = vld [vmem:[%s1 + $0x440] sm:$0xff]
  %v181 = vld [vmem:[%s1 + $0x448] sm:$0xff]
  %v182 = vld [vmem:[%s1 + $0x450] sm:$0xff]
  %v183 = vld [vmem:[%s1 + $0x458] sm:$0xff]
  %v184 = vld [vmem:[%s1 + $0x460] sm:$0xff]
  %v185 = vld [vmem:[%s1 + $0x468] sm:$0xff]
  %v186 = vld [vmem:[%s1 + $0x470] sm:$0xff]
  %v187 = vld [vmem:[%s1 + $0x478] sm:$0xff]
  %v188 = vld [vmem:[%s1 + $0x480] sm:$0xff]
  %v189 = vld [vmem:[%s1 + $0x488] sm:$0xff]
  %v190 = vld [vmem:[%s1 + $0x490] sm:$0xff]
  %v191 = vld [vmem:[%s2] sm:$0xff]
  %v192 = vld [vmem:[%s2 + $0x8] sm:$0xff]
  %v193 = vld [vmem:[%s2 + $0x10] sm:$0xff]
  %195 = vset.pattern.permute.xlu0 0
  %196 = vperm.xlu0 %195, %v191
  %v197 = vpop.permute.xlu0 %196
  %200 = vset.pattern.permute.xlu0 0
  %201 = vperm.xlu0 %200, %v192
  %v202 = vpop.permute.xlu0 %201
  %205 = vset.pattern.permute.xlu0 0
  %206 = vperm.xlu0 %205, %v193
  %v207 = vpop.permute.xlu0 %206
  %vm209 = vcmask 195584
  %v211 = vsel %vm209, %v23, 0
  %v214 = vsel %vm209, %v33, 0
  %v217 = vsel %vm209, %v43, 0
  %219 = vmatpush.msra.mxu0 %v59
  %220 = vmatpush.msra.mxu0 %v58
  %221 = vmatpush.msra.mxu0 %v57
  %222 = vmatpush.msra.mxu0 %v56
  %223 = vmatpush.msra.mxu0 %v55
  %224 = vmatpush.msra.mxu0 %v54
  %225 = vmatpush.msra.mxu0 %v53
  %226 = vmatpush.msra.mxu0 %v52
  %227 = vmatpush.msra.mxu0 %v51
  %228 = vmatpush.msra.mxu0 %v50
  %229 = vmatpush.msra.mxu0 %v49
  %230 = vmatpush.msra.mxu0 %v48
  %231 = vmatpush.msra.mxu0 %v47
  %232 = vmatpush.msra.mxu0 %v46
  %233 = vmatpush.msra.mxu0 %v45
  %234 = vmatpush.msra.mxu0 %v44
  %235 = vmatmul.f32.gmra.mxu0 %v14
  %v236 = vpop.f32.mrf.mxu0
  %v237 = vadd.f32 %v197, %v236
  %238 = vmatmul.f32.gmra.mxu0 %v24
  %v239 = vpop.f32.mrf.mxu0
  %v240 = vadd.f32 %v202, %v239
  %241 = vmatmul.f32.gmra.mxu0 %v34
  %v242 = vpop.f32.mrf.mxu0
  %v243 = vadd.f32 %v207, %v242
  %244 = vdwg.mxu0
  %245 = vmatpush.msra.mxu0 %v75
  %246 = vmatpush.msra.mxu0 %v74
  %247 = vmatpush.msra.mxu0 %v73
  %248 = vmatpush.msra.mxu0 %v72
  %249 = vmatpush.msra.mxu0 %v71
  %250 = vmatpush.msra.mxu0 %v70
  %251 = vmatpush.msra.mxu0 %v69
  %252 = vmatpush.msra.mxu0 %v68
  %253 = vmatpush.msra.mxu0 %v67
  %254 = vmatpush.msra.mxu0 %v66
  %255 = vmatpush.msra.mxu0 %v65
  %256 = vmatpush.msra.mxu0 %v64
  %257 = vmatpush.msra.mxu0 %v63
  %258 = vmatpush.msra.mxu0 %v62
  %259 = vmatpush.msra.mxu0 %v61
  %260 = vmatpush.msra.mxu0 %v60
  %261 = vmatmul.f32.gmra.mxu0 %v15
  %v262 = vpop.f32.mrf.mxu0
  %v263 = vadd.f32 %v237, %v262
  %264 = vmatmul.f32.gmra.mxu0 %v25
  %v265 = vpop.f32.mrf.mxu0
  %v266 = vadd.f32 %v240, %v265
  %267 = vmatmul.f32.gmra.mxu0 %v35
  %v268 = vpop.f32.mrf.mxu0
  %v269 = vadd.f32 %v243, %v268
  %270 = vdwg.mxu0
  %271 = vmatpush.msra.mxu0 %v91
  %272 = vmatpush.msra.mxu0 %v90
  %273 = vmatpush.msra.mxu0 %v89
  %274 = vmatpush.msra.mxu0 %v88
  %275 = vmatpush.msra.mxu0 %v87
  %276 = vmatpush.msra.mxu0 %v86
  %277 = vmatpush.msra.mxu0 %v85
  %278 = vmatpush.msra.mxu0 %v84
  %279 = vmatpush.msra.mxu0 %v83
  %280 = vmatpush.msra.mxu0 %v82
  %281 = vmatpush.msra.mxu0 %v81
  %282 = vmatpush.msra.mxu0 %v80
  %283 = vmatpush.msra.mxu0 %v79
  %284 = vmatpush.msra.mxu0 %v78
  %285 = vmatpush.msra.mxu0 %v77
  %286 = vmatpush.msra.mxu0 %v76
  %287 = vmatmul.f32.gmra.mxu0 %v16
  %v288 = vpop.f32.mrf.mxu0
  %v289 = vadd.f32 %v263, %v288
  %290 = vmatmul.f32.gmra.mxu0 %v26
  %v291 = vpop.f32.mrf.mxu0
  %v292 = vadd.f32 %v266, %v291
  %293 = vmatmul.f32.gmra.mxu0 %v36
  %v294 = vpop.f32.mrf.mxu0
  %v295 = vadd.f32 %v269, %v294
  %296 = vdwg.mxu0
  %297 = vmatpush.msra.mxu0 %v107
  %298 = vmatpush.msra.mxu0 %v106
  %299 = vmatpush.msra.mxu0 %v105
  %300 = vmatpush.msra.mxu0 %v104
  %301 = vmatpush.msra.mxu0 %v103
  %302 = vmatpush.msra.mxu0 %v102
  %303 = vmatpush.msra.mxu0 %v101
  %304 = vmatpush.msra.mxu0 %v100
  %305 = vmatpush.msra.mxu0 %v99
  %306 = vmatpush.msra.mxu0 %v98
  %307 = vmatpush.msra.mxu0 %v97
  %308 = vmatpush.msra.mxu0 %v96
  %309 = vmatpush.msra.mxu0 %v95
  %310 = vmatpush.msra.mxu0 %v94
  %311 = vmatpush.msra.mxu0 %v93
  %312 = vmatpush.msra.mxu0 %v92
  %313 = vmatmul.f32.gmra.mxu0 %v17
  %v314 = vpop.f32.mrf.mxu0
  %v315 = vadd.f32 %v289, %v314
  %316 = vmatmul.f32.gmra.mxu0 %v27
  %v317 = vpop.f32.mrf.mxu0
  %v318 = vadd.f32 %v292, %v317
  %319 = vmatmul.f32.gmra.mxu0 %v37
  %v320 = vpop.f32.mrf.mxu0
  %v321 = vadd.f32 %v295, %v320
  %322 = vdwg.mxu0
  %323 = vmatpush.msra.mxu0 %v123
  %324 = vmatpush.msra.mxu0 %v122
  %325 = vmatpush.msra.mxu0 %v121
  %326 = vmatpush.msra.mxu0 %v120
  %327 = vmatpush.msra.mxu0 %v119
  %328 = vmatpush.msra.mxu0 %v118
  %329 = vmatpush.msra.mxu0 %v117
  %330 = vmatpush.msra.mxu0 %v116
  %331 = vmatpush.msra.mxu0 %v115
  %332 = vmatpush.msra.mxu0 %v114
  %333 = vmatpush.msra.mxu0 %v113
  %334 = vmatpush.msra.mxu0 %v112
  %335 = vmatpush.msra.mxu0 %v111
  %336 = vmatpush.msra.mxu0 %v110
  %337 = vmatpush.msra.mxu0 %v109
  %338 = vmatpush.msra.mxu0 %v108
  %339 = vmatmul.f32.gmra.mxu0 %v18
  %v340 = vpop.f32.mrf.mxu0
  %v341 = vadd.f32 %v315, %v340
  %342 = vmatmul.f32.gmra.mxu0 %v28
  %v343 = vpop.f32.mrf.mxu0
  %v344 = vadd.f32 %v318, %v343
  %345 = vmatmul.f32.gmra.mxu0 %v38
  %v346 = vpop.f32.mrf.mxu0
  %v347 = vadd.f32 %v321, %v346
  %348 = vdwg.mxu0
  %349 = vmatpush.msra.mxu0 %v139
  %350 = vmatpush.msra.mxu0 %v138
  %351 = vmatpush.msra.mxu0 %v137
  %352 = vmatpush.msra.mxu0 %v136
  %353 = vmatpush.msra.mxu0 %v135
  %354 = vmatpush.msra.mxu0 %v134
  %355 = vmatpush.msra.mxu0 %v133
  %356 = vmatpush.msra.mxu0 %v132
  %357 = vmatpush.msra.mxu0 %v131
  %358 = vmatpush.msra.mxu0 %v130
  %359 = vmatpush.msra.mxu0 %v129
  %360 = vmatpush.msra.mxu0 %v128
  %361 = vmatpush.msra.mxu0 %v127
  %362 = vmatpush.msra.mxu0 %v126
  %363 = vmatpush.msra.mxu0 %v125
  %364 = vmatpush.msra.mxu0 %v124
  %365 = vmatmul.f32.gmra.mxu0 %v19
  %v366 = vpop.f32.mrf.mxu0
  %v367 = vadd.f32 %v341, %v366
  %368 = vmatmul.f32.gmra.mxu0 %v29
  %v369 = vpop.f32.mrf.mxu0
  %v370 = vadd.f32 %v344, %v369
  %371 = vmatmul.f32.gmra.mxu0 %v39
  %v372 = vpop.f32.mrf.mxu0
  %v373 = vadd.f32 %v347, %v372
  %374 = vdwg.mxu0
  %375 = vmatpush.msra.mxu0 %v155
  %376 = vmatpush.msra.mxu0 %v154
  %377 = vmatpush.msra.mxu0 %v153
  %378 = vmatpush.msra.mxu0 %v152
  %379 = vmatpush.msra.mxu0 %v151
  %380 = vmatpush.msra.mxu0 %v150
  %381 = vmatpush.msra.mxu0 %v149
  %382 = vmatpush.msra.mxu0 %v148
  %383 = vmatpush.msra.mxu0 %v147
  %384 = vmatpush.msra.mxu0 %v146
  %385 = vmatpush.msra.mxu0 %v145
  %386 = vmatpush.msra.mxu0 %v144
  %387 = vmatpush.msra.mxu0 %v143
  %388 = vmatpush.msra.mxu0 %v142
  %389 = vmatpush.msra.mxu0 %v141
  %390 = vmatpush.msra.mxu0 %v140
  %391 = vmatmul.f32.gmra.mxu0 %v20
  %v392 = vpop.f32.mrf.mxu0
  %v393 = vadd.f32 %v367, %v392
  %394 = vmatmul.f32.gmra.mxu0 %v30
  %v395 = vpop.f32.mrf.mxu0
  %v396 = vadd.f32 %v370, %v395
  %397 = vmatmul.f32.gmra.mxu0 %v40
  %v398 = vpop.f32.mrf.mxu0
  %v399 = vadd.f32 %v373, %v398
  %400 = vdwg.mxu0
  %401 = vmatpush.msra.mxu0 %v171
  %402 = vmatpush.msra.mxu0 %v170
  %403 = vmatpush.msra.mxu0 %v169
  %404 = vmatpush.msra.mxu0 %v168
  %405 = vmatpush.msra.mxu0 %v167
  %406 = vmatpush.msra.mxu0 %v166
  %407 = vmatpush.msra.mxu0 %v165
  %408 = vmatpush.msra.mxu0 %v164
  %409 = vmatpush.msra.mxu0 %v163
  %410 = vmatpush.msra.mxu0 %v162
  %411 = vmatpush.msra.mxu0 %v161
  %412 = vmatpush.msra.mxu0 %v160
  %413 = vmatpush.msra.mxu0 %v159
  %414 = vmatpush.msra.mxu0 %v158
  %415 = vmatpush.msra.mxu0 %v157
  %416 = vmatpush.msra.mxu0 %v156
  %417 = vmatmul.f32.gmra.mxu0 %v21
  %v418 = vpop.f32.mrf.mxu0
  %v419 = vadd.f32 %v393, %v418
  %420 = vmatmul.f32.gmra.mxu0 %v31
  %v421 = vpop.f32.mrf.mxu0
  %v422 = vadd.f32 %v396, %v421
  %423 = vmatmul.f32.gmra.mxu0 %v41
  %v424 = vpop.f32.mrf.mxu0
  %v425 = vadd.f32 %v399, %v424
  %426 = vdwg.mxu0
  %427 = vmatpush.msra.mxu0 %v187
  %428 = vmatpush.msra.mxu0 %v186
  %429 = vmatpush.msra.mxu0 %v185
  %430 = vmatpush.msra.mxu0 %v184
  %431 = vmatpush.msra.mxu0 %v183
  %432 = vmatpush.msra.mxu0 %v182
  %433 = vmatpush.msra.mxu0 %v181
  %434 = vmatpush.msra.mxu0 %v180
  %435 = vmatpush.msra.mxu0 %v179
  %436 = vmatpush.msra.mxu0 %v178
  %437 = vmatpush.msra.mxu0 %v177
  %438 = vmatpush.msra.mxu0 %v176
  %439 = vmatpush.msra.mxu0 %v175
  %440 = vmatpush.msra.mxu0 %v174
  %441 = vmatpush.msra.mxu0 %v173
  %442 = vmatpush.msra.mxu0 %v172
  %443 = vmatmul.f32.gmra.mxu0 %v22
  %v444 = vpop.f32.mrf.mxu0
  %v445 = vadd.f32 %v419, %v444
  %446 = vmatmul.f32.gmra.mxu0 %v32
  %v447 = vpop.f32.mrf.mxu0
  %v448 = vadd.f32 %v422, %v447
  %449 = vmatmul.f32.gmra.mxu0 %v42
  %v450 = vpop.f32.mrf.mxu0
  %v451 = vadd.f32 %v425, %v450
  %452 = vdwg.mxu0
  %453 = vmatpush.msra.mxu0 0.0
  %454 = vmatpush.msra.mxu0 0.0
  %455 = vmatpush.msra.mxu0 0.0
  %456 = vmatpush.msra.mxu0 0.0
  %457 = vmatpush.msra.mxu0 0.0
  %458 = vmatpush.msra.mxu0 0.0
  %459 = vmatpush.msra.mxu0 0.0
  %460 = vmatpush.msra.mxu0 0.0
  %461 = vmatpush.msra.mxu0 0.0
  %462 = vmatpush.msra.mxu0 0.0
  %463 = vmatpush.msra.mxu0 0.0
  %464 = vmatpush.msra.mxu0 0.0
  %465 = vmatpush.msra.mxu0 0.0
  %466 = vmatpush.msra.mxu0 %v190
  %467 = vmatpush.msra.mxu0 %v189
  %468 = vmatpush.msra.mxu0 %v188
  %469 = vmatmul.f32.gmra.mxu0 %v211
  %v470 = vpop.f32.mrf.mxu0
  %v471 = vadd.f32 %v445, %v470
  %472 = vmatmul.f32.gmra.mxu0 %v214
  %v473 = vpop.f32.mrf.mxu0
  %v474 = vadd.f32 %v448, %v473
  %475 = vmatmul.f32.gmra.mxu0 %v217
  %v476 = vpop.f32.mrf.mxu0
  %v477 = vadd.f32 %v451, %v476
  %478 = vdwg.mxu0
  %479 = vst [vmem:[%s3] sm:$0xff] %v471
  %480 = vst [vmem:[%s3 + $0x8] sm:$0xff] %v474
  %481 = vst [vmem:[%s3 + $0x10] sm:$0xff] %v477
  // Predicated region
  $region14: #{safa_forward.2} parent=0 // pred_check
    _
  $region15: #{safa_forward.2} parent=0 // pred_check_branch
    %483 = sbr.rel (0) target = $region17
  $region16: #{safa_forward.2} parent=0 // pred_region
    _
  $region17: #{safa_forward.2} parent=0 // pred_fallthru
    _
  // Predicated region
  $region18: #{safa_forward.2} parent=0 // pred_check
    _
  $region19: #{safa_forward.2} parent=0 // pred_check_branch
    %485 = sbr.rel (0) target = $region21
  $region20: #{safa_forward.2} parent=0 // pred_region
    _
  $region21: #{safa_forward.2} parent=0 // pred_fallthru
    _

// kernel: safa_forward.3
$region0: #{safa_forward.3}
  #allocation0 [shape = 'u32[]', space=smem, size = 0x4, offset = 0x4, fixed_abs, tag = 'smem constant byte address 0x4 - core index']
  #allocation1 [shape = 'u32[72,128]{1,0:T(1,128)}', space=vmem, size = 0x9000, scoped, tag = 'internal scratch']
  %s0 = inlined_call_operand.vmem [shape: f32[32,432], index: 0, kind: input, shape index: {}]
  %s1 = inlined_call_operand.vmem [shape: f32[432,24], index: 1, kind: input, shape index: {}]
  %s2 = inlined_call_operand.vmem [shape: f32[1,24], index: 2, kind: input, shape index: {}]
  %s3 = inlined_call_operand.vmem [shape: f32[24,8], index: 3, kind: input, shape index: {}]
  %s4 = inlined_call_operand.vmem [shape: f32[8,24], index: 4, kind: input, shape index: {}]
  %s5 = inlined_call_operand.vmem [shape: f32[2,32], index: 5, kind: input, shape index: {}]
  %s6 = inlined_call_operand.vmem [shape: f32[32,2], index: 6, kind: input, shape index: {}]
  %s7 = inlined_call_operand.hbm [shape: f32[32,24], index: 7, kind: output, shape index: {}]
  %s8 = sld [smem:[#allocation0]]
  $region38: #{safa_forward.3} parent=0
    _
  %s10 = ssub.s32 1, %s8
  %s11 = scalar_select 0, %s10, %s8
  $region1: #{safa_forward.3} parent=0
    #allocation2 [shape = 'u8[16384]{0}', space=vmem, size = 0x4000, scoped, tag = 'output window, operand 0, single buffered']
    #allocation3 [shape = 's32[1]{0}', space=sflag, size = 0x4, scoped, tag = 'scoped memory for safa_forward.3']
    %12 = vsyncpa [#allocation3], 0
    // Predicated region
    $region2: #{safa_forward.3} parent=1 // pred_check
      _
    $region3: #{safa_forward.3} parent=1 // pred_check_branch
      %14 = sbr.rel (0) target = $region5
    $region4: #{safa_forward.3} parent=1 // pred_region
      _
    $region5: #{safa_forward.3} parent=1 // pred_fallthru
      _
    // Predicated region
    $region6: #{safa_forward.3} parent=1 // pred_check
      _
    $region7: #{safa_forward.3} parent=1 // pred_check_branch
      %16 = sbr.rel (0) target = $region9
    $region8: #{safa_forward.3} parent=1 // pred_region
      _
    $region9: #{safa_forward.3} parent=1 // pred_fallthru
      _
    // Predicated region
    $region10: #{safa_forward.3} parent=1 // pred_check
      _
    $region11: #{safa_forward.3} parent=1 // pred_check_branch
      %18 = sbr.rel (0) target = $region13
    $region12: #{safa_forward.3} parent=1 // pred_region
      _
    $region13: #{safa_forward.3} parent=1 // pred_fallthru
      _
    // Predicated region
    $region14: #{safa_forward.3} parent=1 // pred_check
      _
    $region15: #{safa_forward.3} parent=1 // pred_check_branch
      %20 = sbr.rel (0) target = $region17
    $region16: #{safa_forward.3} parent=1 // pred_region
      _
    $region17: #{safa_forward.3} parent=1 // pred_fallthru
      _
    // Predicated region
    $region18: #{safa_forward.3} parent=1 // pred_check
      _
    $region19: #{safa_forward.3} parent=1 // pred_check_branch
      %22 = sbr.rel (0) target = $region21
    $region20: #{safa_forward.3} parent=1 // pred_region
      _
    $region21: #{safa_forward.3} parent=1 // pred_fallthru
      _
    // Predicated region
    $region22: #{safa_forward.3} parent=1 // pred_check
      _
    $region23: #{safa_forward.3} parent=1 // pred_check_branch
      %24 = sbr.rel (0) target = $region25
    $region24: #{safa_forward.3} parent=1 // pred_region
      _
    $region25: #{safa_forward.3} parent=1 // pred_fallthru
      _
    // Predicated region
    $region26: #{safa_forward.3} parent=1 // pred_check
      _
    $region27: #{safa_forward.3} parent=1 // pred_check_branch
      %26 = sbr.rel (0) target = $region29
    $region28: #{safa_forward.3} parent=1 // pred_region
      _
    $region29: #{safa_forward.3} parent=1 // pred_fallthru
      _
    %v27 = vld [vmem:[%s0] sm:$0xff]
    %v28 = vld [vmem:[%s0 + $0x8] sm:$0xff]
    %v29 = vld [vmem:[%s0 + $0x10] sm:$0xff]
    %v30 = vld [vmem:[%s0 + $0x18] sm:$0xff]
    %v31 = vld [vmem:[%s0 + $0x20] sm:$0xff]
    %v32 = vld [vmem:[%s0 + $0x28] sm:$0xff]
    %v33 = vld [vmem:[%s0 + $0x30] sm:$0xff]
    %v34 = vld [vmem:[%s0 + $0x38] sm:$0xff]
    %v35 = vld [vmem:[%s0 + $0x40] sm:$0xff]
    %v36 = vld [vmem:[%s0 + $0x48] sm:$0xff]
    %v37 = vld [vmem:[%s0 + $0x50] sm:$0xff]
    %v38 = vld [vmem:[%s0 + $0x58] sm:$0xff]
    %v39 = vld [vmem:[%s0 + $0x60] sm:$0xff]
    %v40 = vld [vmem:[%s0 + $0x68] sm:$0xff]
    %v41 = vld [vmem:[%s0 + $0x70] sm:$0xff]
    %v42 = vld [vmem:[%s0 + $0x78] sm:$0xff]
    %v43 = vld [vmem:[%s1] sm:$0xff]
    %v44 = vld [vmem:[%s1 + $0x8] sm:$0xff]
    %v45 = vld [vmem:[%s1 + $0x10] sm:$0xff]
    %v46 = vld [vmem:[%s1 + $0x18] sm:$0xff]
    %v47 = vld [vmem:[%s1 + $0x20] sm:$0xff]
    %v48 = vld [vmem:[%s1 + $0x28] sm:$0xff]
    %v49 = vld [vmem:[%s1 + $0x30] sm:$0xff]
    %v50 = vld [vmem:[%s1 + $0x38] sm:$0xff]
    %v51 = vld [vmem:[%s1 + $0x40] sm:$0xff]
    %v52 = vld [vmem:[%s1 + $0x48] sm:$0xff]
    %v53 = vld [vmem:[%s1 + $0x50] sm:$0xff]
    %v54 = vld [vmem:[%s1 + $0x58] sm:$0xff]
    %v55 = vld [vmem:[%s1 + $0x60] sm:$0xff]
    %v56 = vld [vmem:[%s1 + $0x68] sm:$0xff]
    %v57 = vld [vmem:[%s1 + $0x70] sm:$0xff]
    %v58 = vld [vmem:[%s1 + $0x78] sm:$0xff]
    %v59 = vld [vmem:[%s1 + $0x80] sm:$0xff]
    %v60 = vld [vmem:[%s1 + $0x88] sm:$0xff]
    %v61 = vld [vmem:[%s1 + $0x90] sm:$0xff]
    %v62 = vld [vmem:[%s1 + $0x98] sm:$0xff]
    %v63 = vld [vmem:[%s1 + $0xa0] sm:$0xff]
    %v64 = vld [vmem:[%s1 + $0xa8] sm:$0xff]
    %v65 = vld [vmem:[%s1 + $0xb0] sm:$0xff]
    %v66 = vld [vmem:[%s1 + $0xb8] sm:$0xff]
    %v67 = vld [vmem:[%s1 + $0xc0] sm:$0xff]
    %v68 = vld [vmem:[%s1 + $0xc8] sm:$0xff]
    %v69 = vld [vmem:[%s1 + $0xd0] sm:$0xff]
    %v70 = vld [vmem:[%s1 + $0xd8] sm:$0xff]
    %v71 = vld [vmem:[%s1 + $0xe0] sm:$0xff]
    %v72 = vld [vmem:[%s1 + $0xe8] sm:$0xff]
    %v73 = vld [vmem:[%s1 + $0xf0] sm:$0xff]
    %v74 = vld [vmem:[%s1 + $0xf8] sm:$0xff]
    %v75 = vld [vmem:[%s1 + $0x100] sm:$0xff]
    %v76 = vld [vmem:[%s1 + $0x108] sm:$0xff]
    %v77 = vld [vmem:[%s1 + $0x110] sm:$0xff]
    %v78 = vld [vmem:[%s1 + $0x118] sm:$0xff]
    %v79 = vld [vmem:[%s1 + $0x120] sm:$0xff]
    %v80 = vld [vmem:[%s1 + $0x128] sm:$0xff]
    %v81 = vld [vmem:[%s1 + $0x130] sm:$0xff]
    %v82 = vld [vmem:[%s1 + $0x138] sm:$0xff]
    %v83 = vld [vmem:[%s1 + $0x140] sm:$0xff]
    %v84 = vld [vmem:[%s1 + $0x148] sm:$0xff]
    %v85 = vld [vmem:[%s1 + $0x150] sm:$0xff]
    %v86 = vld [vmem:[%s1 + $0x158] sm:$0xff]
    %v87 = vld [vmem:[%s1 + $0x160] sm:$0xff]
    %v88 = vld [vmem:[%s1 + $0x168] sm:$0xff]
    %v89 = vld [vmem:[%s1 + $0x170] sm:$0xff]
    %v90 = vld [vmem:[%s1 + $0x178] sm:$0xff]
    %v91 = vld [vmem:[%s1 + $0x180] sm:$0xff]
    %v92 = vld [vmem:[%s1 + $0x188] sm:$0xff]
    %v93 = vld [vmem:[%s1 + $0x190] sm:$0xff]
    %v94 = vld [vmem:[%s1 + $0x198] sm:$0xff]
    %v95 = vld [vmem:[%s1 + $0x1a0] sm:$0xff]
    %v96 = vld [vmem:[%s1 + $0x1a8] sm:$0xff]
    %v97 = vld [vmem:[%s2] sm:$0x1]
    %v99 = vperm.slane %v97, 0
    %vm101 = vcmask 392192
    %v103 = vsel %vm101, %v30, 0
    %v106 = vsel %vm101, %v34, 0
    %v109 = vsel %vm101, %v38, 0
    %v112 = vsel %vm101, %v42, 0
    %114 = vmatpush.msra.mxu0 %v58
    %115 = vmatpush.msra.mxu0 %v57
    %116 = vmatpush.msra.mxu0 %v56
    %117 = vmatpush.msra.mxu0 %v55
    %118 = vmatpush.msra.mxu0 %v54
    %119 = vmatpush.msra.mxu0 %v53
    %120 = vmatpush.msra.mxu0 %v52
    %121 = vmatpush.msra.mxu0 %v51
    %122 = vmatpush.msra.mxu0 %v50
    %123 = vmatpush.msra.mxu0 %v49
    %124 = vmatpush.msra.mxu0 %v48
    %125 = vmatpush.msra.mxu0 %v47
    %126 = vmatpush.msra.mxu0 %v46
    %127 = vmatpush.msra.mxu0 %v45
    %128 = vmatpush.msra.mxu0 %v44
    %129 = vmatpush.msra.mxu0 %v43
    %130 = vmatmul.f32.gmra.mxu0 %v27
    %v131 = vpop.f32.mrf.mxu0
    %v132 = vadd.f32 %v99, %v131
    %133 = vmatmul.f32.gmra.mxu0 %v31
    %v134 = vpop.f32.mrf.mxu0
    %v135 = vadd.f32 %v99, %v134
    %136 = vmatmul.f32.gmra.mxu0 %v35
    %v137 = vpop.f32.mrf.mxu0
    %v138 = vadd.f32 %v99, %v137
    %139 = vmatmul.f32.gmra.mxu0 %v39
    %v140 = vpop.f32.mrf.mxu0
    %v141 = vadd.f32 %v99, %v140
    %142 = vdwg.mxu0
    %143 = vmatpush.msra.mxu0 %v74
    %144 = vmatpush.msra.mxu0 %v73
    %145 = vmatpush.msra.mxu0 %v72
    %146 = vmatpush.msra.mxu0 %v71
    %147 = vmatpush.msra.mxu0 %v70
    %148 = vmatpush.msra.mxu0 %v69
    %149 = vmatpush.msra.mxu0 %v68
    %150 = vmatpush.msra.mxu0 %v67
    %151 = vmatpush.msra.mxu0 %v66
    %152 = vmatpush.msra.mxu0 %v65
    %153 = vmatpush.msra.mxu0 %v64
    %154 = vmatpush.msra.mxu0 %v63
    %155 = vmatpush.msra.mxu0 %v62
    %156 = vmatpush.msra.mxu0 %v61
    %157 = vmatpush.msra.mxu0 %v60
    %158 = vmatpush.msra.mxu0 %v59
    %159 = vmatmul.f32.gmra.mxu0 %v28
    %v160 = vpop.f32.mrf.mxu0
    %v161 = vadd.f32 %v132, %v160
    %162 = vmatmul.f32.gmra.mxu0 %v32
    %v163 = vpop.f32.mrf.mxu0
    %v164 = vadd.f32 %v135, %v163
    %165 = vmatmul.f32.gmra.mxu0 %v36
    %v166 = vpop.f32.mrf.mxu0
    %v167 = vadd.f32 %v138, %v166
    %168 = vmatmul.f32.gmra.mxu0 %v40
    %v169 = vpop.f32.mrf.mxu0
    %v170 = vadd.f32 %v141, %v169
    %171 = vdwg.mxu0
    %172 = vmatpush.msra.mxu0 %v90
    %173 = vmatpush.msra.mxu0 %v89
    %174 = vmatpush.msra.mxu0 %v88
    %175 = vmatpush.msra.mxu0 %v87
    %176 = vmatpush.msra.mxu0 %v86
    %177 = vmatpush.msra.mxu0 %v85
    %178 = vmatpush.msra.mxu0 %v84
    %179 = vmatpush.msra.mxu0 %v83
    %180 = vmatpush.msra.mxu0 %v82
    %181 = vmatpush.msra.mxu0 %v81
    %182 = vmatpush.msra.mxu0 %v80
    %183 = vmatpush.msra.mxu0 %v79
    %184 = vmatpush.msra.mxu0 %v78
    %185 = vmatpush.msra.mxu0 %v77
    %186 = vmatpush.msra.mxu0 %v76
    %187 = vmatpush.msra.mxu0 %v75
    %188 = vmatmul.f32.gmra.mxu0 %v29
    %v189 = vpop.f32.mrf.mxu0
    %v190 = vadd.f32 %v161, %v189
    %191 = vmatmul.f32.gmra.mxu0 %v33
    %v192 = vpop.f32.mrf.mxu0
    %v193 = vadd.f32 %v164, %v192
    %194 = vmatmul.f32.gmra.mxu0 %v37
    %v195 = vpop.f32.mrf.mxu0
    %v196 = vadd.f32 %v167, %v195
    %197 = vmatmul.f32.gmra.mxu0 %v41
    %v198 = vpop.f32.mrf.mxu0
    %v199 = vadd.f32 %v170, %v198
    %200 = vdwg.mxu0
    %201 = vmatpush.msra.mxu0 0.0
    %202 = vmatpush.msra.mxu0 0.0
    %203 = vmatpush.msra.mxu0 0.0
    %204 = vmatpush.msra.mxu0 0.0
    %205 = vmatpush.msra.mxu0 0.0
    %206 = vmatpush.msra.mxu0 0.0
    %207 = vmatpush.msra.mxu0 0.0
    %208 = vmatpush.msra.mxu0 0.0
    %209 = vmatpush.msra.mxu0 0.0
    %210 = vmatpush.msra.mxu0 0.0
    %211 = vmatpush.msra.mxu0 %v96
    %212 = vmatpush.msra.mxu0 %v95
    %213 = vmatpush.msra.mxu0 %v94
    %214 = vmatpush.msra.mxu0 %v93
    %215 = vmatpush.msra.mxu0 %v92
    %216 = vmatpush.msra.mxu0 %v91
    %217 = vmatmul.f32.gmra.mxu0 %v103
    %v218 = vpop.f32.mrf.mxu0
    %v219 = vadd.f32 %v190, %v218
    %220 = vmatmul.f32.gmra.mxu0 %v106
    %v221 = vpop.f32.mrf.mxu0
    %v222 = vadd.f32 %v193, %v221
    %223 = vmatmul.f32.gmra.mxu0 %v109
    %v224 = vpop.f32.mrf.mxu0
    %v225 = vadd.f32 %v196, %v224
    %226 = vmatmul.f32.gmra.mxu0 %v112
    %v227 = vpop.f32.mrf.mxu0
    %v228 = vadd.f32 %v199, %v227
    %229 = vdwg.mxu0
    %v230 = vld [vmem:[%s5] sm:$0x3]
    %vm231 = vcmask 261120
    %v233 = vsel %vm231, %v230, 0
    %235 = vmatpush.msra.mxu0 0.0
    %236 = vmatpush.msra.mxu0 0.0
    %237 = vmatpush.msra.mxu0 0.0
    %238 = vmatpush.msra.mxu0 0.0
    %239 = vmatpush.msra.mxu0 0.0
    %240 = vmatpush.msra.mxu0 0.0
    %241 = vmatpush.msra.mxu0 0.0
    %242 = vmatpush.msra.mxu0 0.0
    %243 = vmatpush.msra.mxu0 0.0
    %244 = vmatpush.msra.mxu0 0.0
    %245 = vmatpush.msra.mxu0 0.0
    %246 = vmatpush.msra.mxu0 0.0
    %247 = vmatpush.msra.mxu0 %v228
    %248 = vmatpush.msra.mxu0 %v225
    %249 = vmatpush.msra.mxu0 %v222
    %250 = vmatpush.msra.mxu0 %v219
    %251 = vmatmul.f32.gmra.mxu0 %v233
    %v252 = vpop.f32.mrf.mxu0
    %v253 = vadd.f32 0.0, %v252
    %254 = vdwg.mxu0
    %v255 = vld [vmem:[%s3] sm:$0xff]
    %v256 = vld [vmem:[%s3 + $0x8] sm:$0xff]
    %v257 = vld [vmem:[%s3 + $0x10] sm:$0xff]
    %vm258 = vcmask 195584
    %v260 = vsel %vm258, %v253, 0
    %262 = vmatpush.msra.mxu0 0.0
    %263 = vmatpush.msra.mxu0 0.0
    %264 = vmatpush.msra.mxu0 0.0
    %265 = vmatpush.msra.mxu0 0.0
    %266 = vmatpush.msra.mxu0 0.0
    %267 = vmatpush.msra.mxu0 0.0
    %268 = vmatpush.msra.mxu0 0.0
    %269 = vmatpush.msra.mxu0 0.0
    %270 = vmatpush.msra.mxu0 0.0
    %271 = vmatpush.msra.mxu0 0.0
    %272 = vmatpush.msra.mxu0 0.0
    %273 = vmatpush.msra.mxu0 0.0
    %274 = vmatpush.msra.mxu0 0.0
    %275 = vmatpush.msra.mxu0 %v257
    %276 = vmatpush.msra.mxu0 %v256
    %277 = vmatpush.msra.mxu0 %v255
    %278 = vmatmul.f32.gmra.mxu0 %v260
    %v279 = vpop.f32.mrf.mxu0
    %v280 = vadd.f32 0.0, %v279
    %281 = vdwg.mxu0
    %v282 = vmax.f32 %v280, 0.0
    %v283 = vld [vmem:[%s4] sm:$0xff]
    %vm284 = vcmask 64512
    %v286 = vsel %vm284, %v282, 0
    %288 = vmatpush.msra.mxu0 0.0
    %289 = vmatpush.msra.mxu0 0.0
    %290 = vmatpush.msra.mxu0 0.0
    %291 = vmatpush.msra.mxu0 0.0
    %292 = vmatpush.msra.mxu0 0.0
    %293 = vmatpush.msra.mxu0 0.0
    %294 = vmatpush.msra.mxu0 0.0
    %295 = vmatpush.msra.mxu0 0.0
    %296 = vmatpush.msra.mxu0 0.0
    %297 = vmatpush.msra.mxu0 0.0
    %298 = vmatpush.msra.mxu0 0.0
    %299 = vmatpush.msra.mxu0 0.0
    %300 = vmatpush.msra.mxu0 0.0
    %301 = vmatpush.msra.mxu0 0.0
    %302 = vmatpush.msra.mxu0 0.0
    %303 = vmatpush.msra.mxu0 %v283
    %304 = vmatmul.f32.gmra.mxu0 %v286
    %v305 = vpop.f32.mrf.mxu0
    %v306 = vadd.f32 0.0, %v305
    %307 = vdwg.mxu0
    %v308 = vxor.u32 %v306, 2147483648
    %v309 = vmul.f32 %v308, 1.442695
    %v310 = vpow.pop %v309
    %v311 = vadd.f32 %v310, 1.0
    %v312 = vrcp.pop %v311
    %v313 = vmul.f32 %v311, %v312
    %v314 = vsub.f32 1.0, %v313
    %v315 = vmul.f32 %v312, %v314
    %v316 = vadd.f32 %v312, %v315
    %vm317 = vweird.f32 %v311
    %vm318 = vweird.f32 %v312
    %vm319 = vmor %vm317, %vm318
    %v320 = vsel %vm319, %v312, %v316
    %v321 = vand.u32 2147483647, %v311
    %vm322 = vcmp.eq.f32.partialorder %v321, 8.507059e+37
    %v323 = vand.u32 %v311, 2147483648
    %v324 = vor.u32 1.1754944e-38, %v323
    %v325 = vsel %vm322, %v324, %v320
    %v326 = vmul.f32 1.0, %v325
    %v327 = vld [vmem:[%s6] sm:$0xff]
    %v328 = vld [vmem:[%s6 + $0x8] sm:$0xff]
    %v329 = vld [vmem:[%s6 + $0x10] sm:$0xff]
    %v330 = vld [vmem:[%s6 + $0x18] sm:$0xff]
    %vm331 = vcmask 15360
    %v333 = vsel %vm331, %v327, 0
    %v336 = vsel %vm331, %v328, 0
    %v339 = vsel %vm331, %v329, 0
    %v342 = vsel %vm331, %v330, 0
    %vm344 = vcmask 1041408
    %v346 = vsel %vm344, %v326, 0
    %348 = vmatpush.msra.mxu0 0.0
    %349 = vmatpush.msra.mxu0 0.0
    %350 = vmatpush.msra.mxu0 0.0
    %351 = vmatpush.msra.mxu0 0.0
    %352 = vmatpush.msra.mxu0 0.0
    %353 = vmatpush.msra.mxu0 0.0
    %354 = vmatpush.msra.mxu0 0.0
    %355 = vmatpush.msra.mxu0 0.0
    %356 = vmatpush.msra.mxu0 0.0
    %357 = vmatpush.msra.mxu0 0.0
    %358 = vmatpush.msra.mxu0 0.0
    %359 = vmatpush.msra.mxu0 0.0
    %360 = vmatpush.msra.mxu0 0.0
    %361 = vmatpush.msra.mxu0 0.0
    %362 = vmatpush.msra.mxu0 0.0
    %363 = vmatpush.msra.mxu0 %v346
    %364 = vmatmul.f32.gmra.mxu0 %v333
    %v365 = vpop.f32.mrf.mxu0
    %v366 = vadd.f32 0.0, %v365
    %367 = vmatmul.f32.gmra.mxu0 %v336
    %v368 = vpop.f32.mrf.mxu0
    %v369 = vadd.f32 0.0, %v368
    %370 = vmatmul.f32.gmra.mxu0 %v339
    %v371 = vpop.f32.mrf.mxu0
    %v372 = vadd.f32 0.0, %v371
    %373 = vmatmul.f32.gmra.mxu0 %v342
    %v374 = vpop.f32.mrf.mxu0
    %v375 = vadd.f32 0.0, %v374
    %376 = vdwg.mxu0
    %v377 = vmul.f32 %v219, %v366
    %v378 = vmul.f32 %v222, %v369
    %v379 = vmul.f32 %v225, %v372
    %v380 = vmul.f32 %v228, %v375
    %381 = vst.msk [vmem:[#allocation2] sm:$0xff] %vm258, %v377
    %382 = vst.msk [vmem:[#allocation2 + $0x8] sm:$0xff] %vm258, %v378
    %383 = vst.msk [vmem:[#allocation2 + $0x10] sm:$0xff] %vm258, %v379
    %384 = vst.msk [vmem:[#allocation2 + $0x18] sm:$0xff] %vm258, %v380
    // Predicated region
    $region30: #{safa_forward.3} parent=1 // pred_check
      _
    $region31: #{safa_forward.3} parent=1 // pred_check_branch
      %386 = sbr.rel (0) target = $region33
    $region32: #{safa_forward.3} parent=1 // pred_region
      %388 = vsyncadd [#allocation3], 0
      %s389 = sshll.u32 [#allocation2], 4
      %s390 = int_to_ptr.vmem [resolvable:$true] %s389
      %s391 = sshll.u32 %s7, 4
      %s392 = int_to_ptr.hbm [resolvable:$true] %s391
      %397 = dma.vmem_to_hbm [thread:$0]  %s390, 512, %s392, [#allocation3], 128, 128, 8
    $region33: #{safa_forward.3} parent=1 // pred_fallthru
      _
    // Predicated region
    $region34: #{safa_forward.3} parent=1 // pred_check
      _
    $region35: #{safa_forward.3} parent=1 // pred_check_branch
      %399 = sbr.rel (0) target = $region37
    $region36: #{safa_forward.3} parent=1 // pred_region
      %401 = dma.done [#allocation3], 512
    $region37: #{safa_forward.3} parent=1 // pred_fallthru
      _
    %402 = vsyncpa [#allocation3], 1

</llo_original>
